<compile_context>
chip_gen: v7x
topology: tpu7x:2x2x1
jax: 0.10.0
libtpu: 0.0.40
codegen_flags: <defaults>
</compile_context>

<pallas_src>
import jax
import jax.numpy as jnp
from jax.experimental import pallas as pl
from jax.experimental.pallas import tpu as pltpu

HIDDEN_SIZE = 32
INPUT_SIZE = 3
NUM_LAYERS = 1  # single layer only (as in the PyTorch module)


def janken_lstm_kernel(x_ref, wih_ref, whh_ref, b_ref, wfc_ref, bfc_ref, out_ref):
    """Whole forward in one invocation: un-batched input projection, fully
    unrolled LSTM recurrence (bf16 MXU, f32 state), then the fc head."""
    H = HIDDEN_SIZE
    B, S, I = x_ref.shape

    # ---- Phase 1: single un-batched input projection (off the recurrent chain).
    #   X_proj = x.reshape(B*S, I) @ W_ih^T + (b_ih + b_hh)        -> (B*S, 4H)
    x_flat = x_ref[...].reshape(B * S, I)                     # layout-trivial merge
    x_proj = jnp.dot(x_flat, wih_ref[...],
                     preferred_element_type=jnp.float32) + b_ref[...]
    x_proj = x_proj.reshape(B, S, 4 * H)                      # layout-trivial split

    # ---- Phase 2: recurrence, fully unrolled (S is small & static).
    whh = whh_ref[...]                                        # (H, 4H) bf16
    h = jnp.zeros((B, H), jnp.float32)
    c = jnp.zeros((B, H), jnp.float32)
    for t in range(S):
        # bf16 x bf16 -> f32 accumulate: one MXU pass on the serial chain.
        gates = x_proj[:, t, :] + jnp.dot(h.astype(jnp.bfloat16), whh,
                                          preferred_element_type=jnp.float32)
        sig = jax.nn.sigmoid(gates)               # one full-width EUP pass (i,f,o)
        g_g = jnp.tanh(gates[:, 2 * H:3 * H])     # tanh only on the g gate
        i_g = sig[:, 0 * H:1 * H]
        f_g = sig[:, 1 * H:2 * H]
        o_g = sig[:, 3 * H:4 * H]
        c = f_g * c + i_g * g_g
        h = o_g * jnp.tanh(c)

    # ---- Phase 3: fc head on the final hidden state (single tiny store).
    out_ref[...] = (jnp.dot(h, wfc_ref[...], preferred_element_type=jnp.float32)
                    + bfc_ref[...])


def prepare_params(params):
    """One-time parameter prep: transpose / fuse bias / cast.  Keeps the
    per-call wrapper free of param-massaging HLO ops."""
    return {
        "wih_t": jnp.asarray(params["w_ih"].T, jnp.float32),          # (I, 4H)
        "whh_t": jnp.asarray(params["w_hh"].T, jnp.bfloat16),         # (H, 4H) bf16
        "bias": (params["b_ih"] + params["b_hh"]).reshape(1, 4 * HIDDEN_SIZE)
                .astype(jnp.float32),                                 # (1, 4H)
        "wfc_t": jnp.asarray(params["w_fc"].T, jnp.float32),          # (H, 3)
        "bfc": params["b_fc"].reshape(1, INPUT_SIZE).astype(jnp.float32),
    }


@jax.jit
def janken_lstm_forward(x, prep):
    """x: (B, S, INPUT_SIZE) float32 (batch_first, like the PyTorch module).
    `prep` is the output of prepare_params (computed once)."""
    B, S, I = x.shape
    assert I == INPUT_SIZE
    vmem = lambda: pl.BlockSpec(memory_space=pltpu.MemorySpace.VMEM)
    return pl.pallas_call(
        janken_lstm_kernel,
        out_shape=jax.ShapeDtypeStruct((B, INPUT_SIZE), jnp.float32),
        in_specs=[vmem() for _ in range(6)],   # tiny full-array blocks, no grid
        out_specs=vmem(),
    )(x, prep["wih_t"], prep["whh_t"], prep["bias"], prep["wfc_t"], prep["bfc"])


def init_params(key):
    """Deterministic init mimicking PyTorch defaults (uniform(-k, k))."""
    k_lstm = 1.0 / jnp.sqrt(HIDDEN_SIZE)
    k_fc = 1.0 / jnp.sqrt(HIDDEN_SIZE)
    ks = jax.random.split(key, 6)
    u = lambda k, shape, lim: jax.random.uniform(k, shape, jnp.float32, -lim, lim)
    return {
        "w_ih": u(ks[0], (4 * HIDDEN_SIZE, INPUT_SIZE), k_lstm),
        "w_hh": u(ks[1], (4 * HIDDEN_SIZE, HIDDEN_SIZE), k_lstm),
        "b_ih": u(ks[2], (4 * HIDDEN_SIZE,), k_lstm),
        "b_hh": u(ks[3], (4 * HIDDEN_SIZE,), k_lstm),
        "w_fc": u(ks[4], (INPUT_SIZE, HIDDEN_SIZE), k_fc),
        "b_fc": u(ks[5], (INPUT_SIZE,), k_fc),
    }


def reference_forward(x, params):
    """Pure-JAX f32 reference (same math as torch.nn.LSTM forward + fc)."""
    B = x.shape[0]
    H = HIDDEN_SIZE

    def step(carry, x_t):
        h, c = carry
        gates = (x_t @ params["w_ih"].T + params["b_ih"]
                 + h @ params["w_hh"].T + params["b_hh"])
        i = jax.nn.sigmoid(gates[:, 0 * H:1 * H])
        f = jax.nn.sigmoid(gates[:, 1 * H:2 * H])
        g = jnp.tanh(gates[:, 2 * H:3 * H])
        o = jax.nn.sigmoid(gates[:, 3 * H:4 * H])
        c = f * c + i * g
        h = o * jnp.tanh(c)
        return (h, c), None

    h0 = jnp.zeros((B, H), jnp.float32)
    c0 = jnp.zeros((B, H), jnp.float32)
    (h_last, _), _ = jax.lax.scan(step, (h0, c0), jnp.transpose(x, (1, 0, 2)))
    return h_last @ params["w_fc"].T + params["b_fc"]


if __name__ == "__main__":
    key = jax.random.PRNGKey(0)
    k_x, _ = jax.random.split(key)

    BATCH, SEQ = 2, 8
    x = jax.random.normal(k_x, (BATCH, SEQ, INPUT_SIZE), jnp.float32)
    params = init_params(jax.random.PRNGKey(42))
    prep = prepare_params(params)          # one-time param prep (review item 4)

    out = jax.block_until_ready(janken_lstm_forward(x, prep))
    ref = reference_forward(x, params)

    assert out.shape == (BATCH, INPUT_SIZE)
    # bf16 recurrent matmul (f32 accumulate) -> tolerance loosened per the review.
    assert jnp.allclose(out, ref, atol=2e-2, rtol=2e-2), (out, ref)
    print("KERNEL_OK")
</pallas_src>

<mosaic_0001>
module attributes {stable_mosaic.version = 11 : i64} {
  func.func @janken_lstm_kernel(%arg0: memref<2x8x3xf32, #tpu.memory_space<vmem>>, %arg1: memref<3x128xf32, #tpu.memory_space<vmem>>, %arg2: memref<32x128xbf16, #tpu.memory_space<vmem>>, %arg3: memref<1x128xf32, #tpu.memory_space<vmem>>, %arg4: memref<32x3xf32, #tpu.memory_space<vmem>>, %arg5: memref<1x3xf32, #tpu.memory_space<vmem>>, %arg6: memref<2x3xf32, #tpu.memory_space<vmem>>) attributes {dimension_semantics = [], scalar_prefetch = 0 : i64, scratch_operands = 0 : i64, tpu.core_type = #tpu.core_type<tc>} {
    %c0 = arith.constant 0 : index
    %c0_0 = arith.constant 0 : index
    %c0_1 = arith.constant 0 : index
    %0 = vector.load %arg0[%c0, %c0_0, %c0_1] : memref<2x8x3xf32, #tpu.memory_space<vmem>>, vector<2x8x3xf32>
    %1 = vector.shape_cast %0 : vector<2x8x3xf32> to vector<16x3xf32>
    %c0_2 = arith.constant 0 : index
    %c0_3 = arith.constant 0 : index
    %2 = vector.load %arg1[%c0_2, %c0_3] : memref<3x128xf32, #tpu.memory_space<vmem>>, vector<3x128xf32>
    %cst = arith.constant dense<0.000000e+00> : vector<16x128xf32>
    %3 = tpu.matmul %1, %2, %cst {dimension_numbers = #tpu.dot_dimension_numbers<[1], [0], [0], [1], [0, 0, 1, 1], [], []>} : vector<16x3xf32>, vector<3x128xf32>, vector<16x128xf32> -> vector<16x128xf32>
    %c0_4 = arith.constant 0 : index
    %c0_5 = arith.constant 0 : index
    %4 = vector.load %arg3[%c0_4, %c0_5] : memref<1x128xf32, #tpu.memory_space<vmem>>, vector<1x128xf32>
    %5 = vector.broadcast %4 : vector<1x128xf32> to vector<16x128xf32>
    %6 = arith.addf %3, %5 : vector<16x128xf32>
    %7 = vector.shape_cast %6 : vector<16x128xf32> to vector<2x8x128xf32>
    %c0_6 = arith.constant 0 : index
    %c0_7 = arith.constant 0 : index
    %8 = vector.load %arg2[%c0_6, %c0_7] : memref<32x128xbf16, #tpu.memory_space<vmem>>, vector<32x128xbf16>
    %cst_8 = arith.constant 0.000000e+00 : f32
    %9 = vector.broadcast %cst_8 : f32 to vector<2x32xf32>
    %cst_9 = arith.constant 0.000000e+00 : f32
    %10 = vector.broadcast %cst_9 : f32 to vector<2x32xf32>
    %11 = vector.extract_strided_slice %7 {offsets = [0, 0, 0], sizes = [2, 1, 128], strides = [1, 1, 1]} : vector<2x8x128xf32> to vector<2x1x128xf32>
    %12 = vector.shape_cast %11 : vector<2x1x128xf32> to vector<2x128xf32>
    %13 = arith.truncf %9 : vector<2x32xf32> to vector<2x32xbf16>
    %cst_10 = arith.constant dense<0.000000e+00> : vector<2x128xf32>
    %14 = tpu.matmul %13, %8, %cst_10 {dimension_numbers = #tpu.dot_dimension_numbers<[1], [0], [0], [1], [0, 0, 1, 1], [], []>} : vector<2x32xbf16>, vector<32x128xbf16>, vector<2x128xf32> -> vector<2x128xf32>
    %15 = arith.addf %12, %14 : vector<2x128xf32>
    %16 = arith.negf %15 : vector<2x128xf32>
    %17 = math.exp %16 : vector<2x128xf32>
    %cst_11 = arith.constant 1.000000e+00 : f32
    %18 = vector.broadcast %cst_11 : f32 to vector<2x128xf32>
    %19 = arith.addf %18, %17 : vector<2x128xf32>
    %20 = arith.divf %18, %19 : vector<2x128xf32>
    %21 = vector.extract_strided_slice %15 {offsets = [0, 64], sizes = [2, 32], strides = [1, 1]} : vector<2x128xf32> to vector<2x32xf32>
    %22 = math.tanh %21 : vector<2x32xf32>
    %23 = vector.extract_strided_slice %20 {offsets = [0, 0], sizes = [2, 32], strides = [1, 1]} : vector<2x128xf32> to vector<2x32xf32>
    %24 = vector.extract_strided_slice %20 {offsets = [0, 32], sizes = [2, 32], strides = [1, 1]} : vector<2x128xf32> to vector<2x32xf32>
    %25 = vector.extract_strided_slice %20 {offsets = [0, 96], sizes = [2, 32], strides = [1, 1]} : vector<2x128xf32> to vector<2x32xf32>
    %26 = arith.mulf %24, %10 : vector<2x32xf32>
    %27 = arith.mulf %23, %22 : vector<2x32xf32>
    %28 = arith.addf %26, %27 : vector<2x32xf32>
    %29 = math.tanh %28 : vector<2x32xf32>
    %30 = arith.mulf %25, %29 : vector<2x32xf32>
    %31 = vector.extract_strided_slice %7 {offsets = [0, 1, 0], sizes = [2, 1, 128], strides = [1, 1, 1]} : vector<2x8x128xf32> to vector<2x1x128xf32>
    %32 = vector.shape_cast %31 : vector<2x1x128xf32> to vector<2x128xf32>
    %33 = arith.truncf %30 : vector<2x32xf32> to vector<2x32xbf16>
    %cst_12 = arith.constant dense<0.000000e+00> : vector<2x128xf32>
    %34 = tpu.matmul %33, %8, %cst_12 {dimension_numbers = #tpu.dot_dimension_numbers<[1], [0], [0], [1], [0, 0, 1, 1], [], []>} : vector<2x32xbf16>, vector<32x128xbf16>, vector<2x128xf32> -> vector<2x128xf32>
    %35 = arith.addf %32, %34 : vector<2x128xf32>
    %36 = arith.negf %35 : vector<2x128xf32>
    %37 = math.exp %36 : vector<2x128xf32>
    %cst_13 = arith.constant 1.000000e+00 : f32
    %38 = vector.broadcast %cst_13 : f32 to vector<2x128xf32>
    %39 = arith.addf %38, %37 : vector<2x128xf32>
    %40 = arith.divf %38, %39 : vector<2x128xf32>
    %41 = vector.extract_strided_slice %35 {offsets = [0, 64], sizes = [2, 32], strides = [1, 1]} : vector<2x128xf32> to vector<2x32xf32>
    %42 = math.tanh %41 : vector<2x32xf32>
    %43 = vector.extract_strided_slice %40 {offsets = [0, 0], sizes = [2, 32], strides = [1, 1]} : vector<2x128xf32> to vector<2x32xf32>
    %44 = vector.extract_strided_slice %40 {offsets = [0, 32], sizes = [2, 32], strides = [1, 1]} : vector<2x128xf32> to vector<2x32xf32>
    %45 = vector.extract_strided_slice %40 {offsets = [0, 96], sizes = [2, 32], strides = [1, 1]} : vector<2x128xf32> to vector<2x32xf32>
    %46 = arith.mulf %44, %28 : vector<2x32xf32>
    %47 = arith.mulf %43, %42 : vector<2x32xf32>
    %48 = arith.addf %46, %47 : vector<2x32xf32>
    %49 = math.tanh %48 : vector<2x32xf32>
    %50 = arith.mulf %45, %49 : vector<2x32xf32>
    %51 = vector.extract_strided_slice %7 {offsets = [0, 2, 0], sizes = [2, 1, 128], strides = [1, 1, 1]} : vector<2x8x128xf32> to vector<2x1x128xf32>
    %52 = vector.shape_cast %51 : vector<2x1x128xf32> to vector<2x128xf32>
    %53 = arith.truncf %50 : vector<2x32xf32> to vector<2x32xbf16>
    %cst_14 = arith.constant dense<0.000000e+00> : vector<2x128xf32>
    %54 = tpu.matmul %53, %8, %cst_14 {dimension_numbers = #tpu.dot_dimension_numbers<[1], [0], [0], [1], [0, 0, 1, 1], [], []>} : vector<2x32xbf16>, vector<32x128xbf16>, vector<2x128xf32> -> vector<2x128xf32>
    %55 = arith.addf %52, %54 : vector<2x128xf32>
    %56 = arith.negf %55 : vector<2x128xf32>
    %57 = math.exp %56 : vector<2x128xf32>
    %cst_15 = arith.constant 1.000000e+00 : f32
    %58 = vector.broadcast %cst_15 : f32 to vector<2x128xf32>
    %59 = arith.addf %58, %57 : vector<2x128xf32>
    %60 = arith.divf %58, %59 : vector<2x128xf32>
    %61 = vector.extract_strided_slice %55 {offsets = [0, 64], sizes = [2, 32], strides = [1, 1]} : vector<2x128xf32> to vector<2x32xf32>
    %62 = math.tanh %61 : vector<2x32xf32>
    %63 = vector.extract_strided_slice %60 {offsets = [0, 0], sizes = [2, 32], strides = [1, 1]} : vector<2x128xf32> to vector<2x32xf32>
    %64 = vector.extract_strided_slice %60 {offsets = [0, 32], sizes = [2, 32], strides = [1, 1]} : vector<2x128xf32> to vector<2x32xf32>
    %65 = vector.extract_strided_slice %60 {offsets = [0, 96], sizes = [2, 32], strides = [1, 1]} : vector<2x128xf32> to vector<2x32xf32>
    %66 = arith.mulf %64, %48 : vector<2x32xf32>
    %67 = arith.mulf %63, %62 : vector<2x32xf32>
    %68 = arith.addf %66, %67 : vector<2x32xf32>
    %69 = math.tanh %68 : vector<2x32xf32>
    %70 = arith.mulf %65, %69 : vector<2x32xf32>
    %71 = vector.extract_strided_slice %7 {offsets = [0, 3, 0], sizes = [2, 1, 128], strides = [1, 1, 1]} : vector<2x8x128xf32> to vector<2x1x128xf32>
    %72 = vector.shape_cast %71 : vector<2x1x128xf32> to vector<2x128xf32>
    %73 = arith.truncf %70 : vector<2x32xf32> to vector<2x32xbf16>
    %cst_16 = arith.constant dense<0.000000e+00> : vector<2x128xf32>
    %74 = tpu.matmul %73, %8, %cst_16 {dimension_numbers = #tpu.dot_dimension_numbers<[1], [0], [0], [1], [0, 0, 1, 1], [], []>} : vector<2x32xbf16>, vector<32x128xbf16>, vector<2x128xf32> -> vector<2x128xf32>
    %75 = arith.addf %72, %74 : vector<2x128xf32>
    %76 = arith.negf %75 : vector<2x128xf32>
    %77 = math.exp %76 : vector<2x128xf32>
    %cst_17 = arith.constant 1.000000e+00 : f32
    %78 = vector.broadcast %cst_17 : f32 to vector<2x128xf32>
    %79 = arith.addf %78, %77 : vector<2x128xf32>
    %80 = arith.divf %78, %79 : vector<2x128xf32>
    %81 = vector.extract_strided_slice %75 {offsets = [0, 64], sizes = [2, 32], strides = [1, 1]} : vector<2x128xf32> to vector<2x32xf32>
    %82 = math.tanh %81 : vector<2x32xf32>
    %83 = vector.extract_strided_slice %80 {offsets = [0, 0], sizes = [2, 32], strides = [1, 1]} : vector<2x128xf32> to vector<2x32xf32>
    %84 = vector.extract_strided_slice %80 {offsets = [0, 32], sizes = [2, 32], strides = [1, 1]} : vector<2x128xf32> to vector<2x32xf32>
    %85 = vector.extract_strided_slice %80 {offsets = [0, 96], sizes = [2, 32], strides = [1, 1]} : vector<2x128xf32> to vector<2x32xf32>
    %86 = arith.mulf %84, %68 : vector<2x32xf32>
    %87 = arith.mulf %83, %82 : vector<2x32xf32>
    %88 = arith.addf %86, %87 : vector<2x32xf32>
    %89 = math.tanh %88 : vector<2x32xf32>
    %90 = arith.mulf %85, %89 : vector<2x32xf32>
    %91 = vector.extract_strided_slice %7 {offsets = [0, 4, 0], sizes = [2, 1, 128], strides = [1, 1, 1]} : vector<2x8x128xf32> to vector<2x1x128xf32>
    %92 = vector.shape_cast %91 : vector<2x1x128xf32> to vector<2x128xf32>
    %93 = arith.truncf %90 : vector<2x32xf32> to vector<2x32xbf16>
    %cst_18 = arith.constant dense<0.000000e+00> : vector<2x128xf32>
    %94 = tpu.matmul %93, %8, %cst_18 {dimension_numbers = #tpu.dot_dimension_numbers<[1], [0], [0], [1], [0, 0, 1, 1], [], []>} : vector<2x32xbf16>, vector<32x128xbf16>, vector<2x128xf32> -> vector<2x128xf32>
    %95 = arith.addf %92, %94 : vector<2x128xf32>
    %96 = arith.negf %95 : vector<2x128xf32>
    %97 = math.exp %96 : vector<2x128xf32>
    %cst_19 = arith.constant 1.000000e+00 : f32
    %98 = vector.broadcast %cst_19 : f32 to vector<2x128xf32>
    %99 = arith.addf %98, %97 : vector<2x128xf32>
    %100 = arith.divf %98, %99 : vector<2x128xf32>
    %101 = vector.extract_strided_slice %95 {offsets = [0, 64], sizes = [2, 32], strides = [1, 1]} : vector<2x128xf32> to vector<2x32xf32>
    %102 = math.tanh %101 : vector<2x32xf32>
    %103 = vector.extract_strided_slice %100 {offsets = [0, 0], sizes = [2, 32], strides = [1, 1]} : vector<2x128xf32> to vector<2x32xf32>
    %104 = vector.extract_strided_slice %100 {offsets = [0, 32], sizes = [2, 32], strides = [1, 1]} : vector<2x128xf32> to vector<2x32xf32>
    %105 = vector.extract_strided_slice %100 {offsets = [0, 96], sizes = [2, 32], strides = [1, 1]} : vector<2x128xf32> to vector<2x32xf32>
    %106 = arith.mulf %104, %88 : vector<2x32xf32>
    %107 = arith.mulf %103, %102 : vector<2x32xf32>
    %108 = arith.addf %106, %107 : vector<2x32xf32>
    %109 = math.tanh %108 : vector<2x32xf32>
    %110 = arith.mulf %105, %109 : vector<2x32xf32>
    %111 = vector.extract_strided_slice %7 {offsets = [0, 5, 0], sizes = [2, 1, 128], strides = [1, 1, 1]} : vector<2x8x128xf32> to vector<2x1x128xf32>
    %112 = vector.shape_cast %111 : vector<2x1x128xf32> to vector<2x128xf32>
    %113 = arith.truncf %110 : vector<2x32xf32> to vector<2x32xbf16>
    %cst_20 = arith.constant dense<0.000000e+00> : vector<2x128xf32>
    %114 = tpu.matmul %113, %8, %cst_20 {dimension_numbers = #tpu.dot_dimension_numbers<[1], [0], [0], [1], [0, 0, 1, 1], [], []>} : vector<2x32xbf16>, vector<32x128xbf16>, vector<2x128xf32> -> vector<2x128xf32>
    %115 = arith.addf %112, %114 : vector<2x128xf32>
    %116 = arith.negf %115 : vector<2x128xf32>
    %117 = math.exp %116 : vector<2x128xf32>
    %cst_21 = arith.constant 1.000000e+00 : f32
    %118 = vector.broadcast %cst_21 : f32 to vector<2x128xf32>
    %119 = arith.addf %118, %117 : vector<2x128xf32>
    %120 = arith.divf %118, %119 : vector<2x128xf32>
    %121 = vector.extract_strided_slice %115 {offsets = [0, 64], sizes = [2, 32], strides = [1, 1]} : vector<2x128xf32> to vector<2x32xf32>
    %122 = math.tanh %121 : vector<2x32xf32>
    %123 = vector.extract_strided_slice %120 {offsets = [0, 0], sizes = [2, 32], strides = [1, 1]} : vector<2x128xf32> to vector<2x32xf32>
    %124 = vector.extract_strided_slice %120 {offsets = [0, 32], sizes = [2, 32], strides = [1, 1]} : vector<2x128xf32> to vector<2x32xf32>
    %125 = vector.extract_strided_slice %120 {offsets = [0, 96], sizes = [2, 32], strides = [1, 1]} : vector<2x128xf32> to vector<2x32xf32>
    %126 = arith.mulf %124, %108 : vector<2x32xf32>
    %127 = arith.mulf %123, %122 : vector<2x32xf32>
    %128 = arith.addf %126, %127 : vector<2x32xf32>
    %129 = math.tanh %128 : vector<2x32xf32>
    %130 = arith.mulf %125, %129 : vector<2x32xf32>
    %131 = vector.extract_strided_slice %7 {offsets = [0, 6, 0], sizes = [2, 1, 128], strides = [1, 1, 1]} : vector<2x8x128xf32> to vector<2x1x128xf32>
    %132 = vector.shape_cast %131 : vector<2x1x128xf32> to vector<2x128xf32>
    %133 = arith.truncf %130 : vector<2x32xf32> to vector<2x32xbf16>
    %cst_22 = arith.constant dense<0.000000e+00> : vector<2x128xf32>
    %134 = tpu.matmul %133, %8, %cst_22 {dimension_numbers = #tpu.dot_dimension_numbers<[1], [0], [0], [1], [0, 0, 1, 1], [], []>} : vector<2x32xbf16>, vector<32x128xbf16>, vector<2x128xf32> -> vector<2x128xf32>
    %135 = arith.addf %132, %134 : vector<2x128xf32>
    %136 = arith.negf %135 : vector<2x128xf32>
    %137 = math.exp %136 : vector<2x128xf32>
    %cst_23 = arith.constant 1.000000e+00 : f32
    %138 = vector.broadcast %cst_23 : f32 to vector<2x128xf32>
    %139 = arith.addf %138, %137 : vector<2x128xf32>
    %140 = arith.divf %138, %139 : vector<2x128xf32>
    %141 = vector.extract_strided_slice %135 {offsets = [0, 64], sizes = [2, 32], strides = [1, 1]} : vector<2x128xf32> to vector<2x32xf32>
    %142 = math.tanh %141 : vector<2x32xf32>
    %143 = vector.extract_strided_slice %140 {offsets = [0, 0], sizes = [2, 32], strides = [1, 1]} : vector<2x128xf32> to vector<2x32xf32>
    %144 = vector.extract_strided_slice %140 {offsets = [0, 32], sizes = [2, 32], strides = [1, 1]} : vector<2x128xf32> to vector<2x32xf32>
    %145 = vector.extract_strided_slice %140 {offsets = [0, 96], sizes = [2, 32], strides = [1, 1]} : vector<2x128xf32> to vector<2x32xf32>
    %146 = arith.mulf %144, %128 : vector<2x32xf32>
    %147 = arith.mulf %143, %142 : vector<2x32xf32>
    %148 = arith.addf %146, %147 : vector<2x32xf32>
    %149 = math.tanh %148 : vector<2x32xf32>
    %150 = arith.mulf %145, %149 : vector<2x32xf32>
    %151 = vector.extract_strided_slice %7 {offsets = [0, 7, 0], sizes = [2, 1, 128], strides = [1, 1, 1]} : vector<2x8x128xf32> to vector<2x1x128xf32>
    %152 = vector.shape_cast %151 : vector<2x1x128xf32> to vector<2x128xf32>
    %153 = arith.truncf %150 : vector<2x32xf32> to vector<2x32xbf16>
    %cst_24 = arith.constant dense<0.000000e+00> : vector<2x128xf32>
    %154 = tpu.matmul %153, %8, %cst_24 {dimension_numbers = #tpu.dot_dimension_numbers<[1], [0], [0], [1], [0, 0, 1, 1], [], []>} : vector<2x32xbf16>, vector<32x128xbf16>, vector<2x128xf32> -> vector<2x128xf32>
    %155 = arith.addf %152, %154 : vector<2x128xf32>
    %156 = arith.negf %155 : vector<2x128xf32>
    %157 = math.exp %156 : vector<2x128xf32>
    %cst_25 = arith.constant 1.000000e+00 : f32
    %158 = vector.broadcast %cst_25 : f32 to vector<2x128xf32>
    %159 = arith.addf %158, %157 : vector<2x128xf32>
    %160 = arith.divf %158, %159 : vector<2x128xf32>
    %161 = vector.extract_strided_slice %155 {offsets = [0, 64], sizes = [2, 32], strides = [1, 1]} : vector<2x128xf32> to vector<2x32xf32>
    %162 = math.tanh %161 : vector<2x32xf32>
    %163 = vector.extract_strided_slice %160 {offsets = [0, 0], sizes = [2, 32], strides = [1, 1]} : vector<2x128xf32> to vector<2x32xf32>
    %164 = vector.extract_strided_slice %160 {offsets = [0, 32], sizes = [2, 32], strides = [1, 1]} : vector<2x128xf32> to vector<2x32xf32>
    %165 = vector.extract_strided_slice %160 {offsets = [0, 96], sizes = [2, 32], strides = [1, 1]} : vector<2x128xf32> to vector<2x32xf32>
    %166 = arith.mulf %164, %148 : vector<2x32xf32>
    %167 = arith.mulf %163, %162 : vector<2x32xf32>
    %168 = arith.addf %166, %167 : vector<2x32xf32>
    %169 = math.tanh %168 : vector<2x32xf32>
    %170 = arith.mulf %165, %169 : vector<2x32xf32>
    %c0_26 = arith.constant 0 : index
    %c0_27 = arith.constant 0 : index
    %171 = vector.load %arg4[%c0_26, %c0_27] : memref<32x3xf32, #tpu.memory_space<vmem>>, vector<32x3xf32>
    %cst_28 = arith.constant dense<0.000000e+00> : vector<2x3xf32>
    %172 = tpu.matmul %170, %171, %cst_28 {dimension_numbers = #tpu.dot_dimension_numbers<[1], [0], [0], [1], [0, 0, 1, 1], [], []>} : vector<2x32xf32>, vector<32x3xf32>, vector<2x3xf32> -> vector<2x3xf32>
    %c0_29 = arith.constant 0 : index
    %c0_30 = arith.constant 0 : index
    %173 = vector.load %arg5[%c0_29, %c0_30] : memref<1x3xf32, #tpu.memory_space<vmem>>, vector<1x3xf32>
    %174 = vector.broadcast %173 : vector<1x3xf32> to vector<2x3xf32>
    %175 = arith.addf %172, %174 : vector<2x3xf32>
    %c0_31 = arith.constant 0 : index
    %c0_32 = arith.constant 0 : index
    %176 = vector.load %arg6[%c0_31, %c0_32] : memref<2x3xf32, #tpu.memory_space<vmem>>, vector<2x3xf32>
    tpu.vector_store %arg6[%c0_31, %c0_32], %175 {strides = array<i32>} : memref<2x3xf32, #tpu.memory_space<vmem>>, vector<2x3xf32>,
    return
  }
}

</mosaic_0001>

<llo_original>
// kernel: janken_lstm_forward.1
$region0: #{janken_lstm_forward.1}
  #allocation0 [shape = 'u32[]', space=smem, size = 0x4, offset = 0x4, fixed_abs, tag = 'smem constant byte address 0x4 - core index']
  #allocation1 [shape = 'u32[144,128]{1,0:T(1,128)}', space=vmem, size = 0x12000, scoped, tag = 'internal scratch']
  %s0 = inlined_call_operand.vmem [shape: f32[2,8,3], index: 0, kind: input, shape index: {}]
  %s1 = inlined_call_operand.vmem [shape: f32[3,128], index: 1, kind: input, shape index: {}]
  %s2 = inlined_call_operand.vmem [shape: bf16[32,128], index: 2, kind: input, shape index: {}]
  %s3 = inlined_call_operand.vmem [shape: f32[1,128], index: 3, kind: input, shape index: {}]
  %s4 = inlined_call_operand.vmem [shape: f32[32,3], index: 4, kind: input, shape index: {}]
  %s5 = inlined_call_operand.vmem [shape: f32[1,3], index: 5, kind: input, shape index: {}]
  %s6 = inlined_call_operand.hbm [shape: f32[2,3], index: 6, kind: output, shape index: {}]
  %s7 = sld [smem:[#allocation0]]
  $region34: #{janken_lstm_forward.1} parent=0
    _
  %s9 = ssub.s32 1, %s7
  %s10 = scalar_select 0, %s9, %s7
  $region1: #{janken_lstm_forward.1} parent=0
    #allocation2 [shape = 'u8[1024]{0}', space=vmem, size = 0x400, scoped, tag = 'output window, operand 0, single buffered']
    #allocation3 [shape = 's32[1]{0}', space=sflag, size = 0x4, scoped, tag = 'scoped memory for janken_lstm_forward.1']
    %11 = vsyncpa [#allocation3], 0
    // Predicated region
    $region2: #{janken_lstm_forward.1} parent=1 // pred_check
      _
    $region3: #{janken_lstm_forward.1} parent=1 // pred_check_branch
      %13 = sbr.rel (0) target = $region5
    $region4: #{janken_lstm_forward.1} parent=1 // pred_region
      _
    $region5: #{janken_lstm_forward.1} parent=1 // pred_fallthru
      _
    // Predicated region
    $region6: #{janken_lstm_forward.1} parent=1 // pred_check
      _
    $region7: #{janken_lstm_forward.1} parent=1 // pred_check_branch
      %15 = sbr.rel (0) target = $region9
    $region8: #{janken_lstm_forward.1} parent=1 // pred_region
      _
    $region9: #{janken_lstm_forward.1} parent=1 // pred_fallthru
      _
    // Predicated region
    $region10: #{janken_lstm_forward.1} parent=1 // pred_check
      _
    $region11: #{janken_lstm_forward.1} parent=1 // pred_check_branch
      %17 = sbr.rel (0) target = $region13
    $region12: #{janken_lstm_forward.1} parent=1 // pred_region
      _
    $region13: #{janken_lstm_forward.1} parent=1 // pred_fallthru
      _
    // Predicated region
    $region14: #{janken_lstm_forward.1} parent=1 // pred_check
      _
    $region15: #{janken_lstm_forward.1} parent=1 // pred_check_branch
      %19 = sbr.rel (0) target = $region17
    $region16: #{janken_lstm_forward.1} parent=1 // pred_region
      _
    $region17: #{janken_lstm_forward.1} parent=1 // pred_fallthru
      _
    // Predicated region
    $region18: #{janken_lstm_forward.1} parent=1 // pred_check
      _
    $region19: #{janken_lstm_forward.1} parent=1 // pred_check_branch
      %21 = sbr.rel (0) target = $region21
    $region20: #{janken_lstm_forward.1} parent=1 // pred_region
      _
    $region21: #{janken_lstm_forward.1} parent=1 // pred_fallthru
      _
    // Predicated region
    $region22: #{janken_lstm_forward.1} parent=1 // pred_check
      _
    $region23: #{janken_lstm_forward.1} parent=1 // pred_check_branch
      %23 = sbr.rel (0) target = $region25
    $region24: #{janken_lstm_forward.1} parent=1 // pred_region
      _
    $region25: #{janken_lstm_forward.1} parent=1 // pred_fallthru
      _
    %v25 = vld [vmem:[%s0] sm:$0xff]
    %v26 = vld [vmem:[%s0 + $0x8] sm:$0xff]
    %v27 = vld [vmem:[%s1] sm:$0x7]
    %v28 = vld [vmem:[%s3] sm:$0x1]
    %v30 = vlaneseq
    %v31 = vshrl.u32 %v30, 7
    %v32 = vsub.s32 0, %v31
    %v33 = vrot.slane %v28, %v32
    %vm35 = vcmask 23552
    %v37 = vsel %vm35, %v25, 0
    %v40 = vsel %vm35, %v26, 0
    %vm42 = vcmask 1042432
    %v44 = vsel %vm42, %v27, 0
    %46 = vmatprep.subr.mxu0 0.0
    %47 = vmatpush1.msra.mxu0 %v44
    %48 = vmatprep.subr.mxu0 0.0
    %49 = vmatpush1.msra.mxu0 0.0
    %50 = vmatprep.subr.mxu0 0.0
    %51 = vmatpush1.msra.mxu0 0.0
    %52 = vmatprep.subr.mxu0 0.0
    %53 = vmatpush1.msra.mxu0 0.0
    %54 = vmatprep.subr.mxu0 0.0
    %55 = vmatpush1.msra.mxu0 0.0
    %56 = vmatprep.subr.mxu0 0.0
    %57 = vmatpush1.msra.mxu0 0.0
    %58 = vmatprep.subr.mxu0 0.0
    %59 = vmatpush1.msra.mxu0 0.0
    %60 = vmatprep.subr.mxu0 0.0
    %61 = vmatpush1.msra.mxu0 0.0
    %62 = vmatprep.subr.mxu0 0.0
    %63 = vmatpush1.msra.mxu0 0.0
    %64 = vmatprep.subr.mxu0 0.0
    %65 = vmatpush1.msra.mxu0 0.0
    %66 = vmatprep.subr.mxu0 0.0
    %67 = vmatpush1.msra.mxu0 0.0
    %68 = vmatprep.subr.mxu0 0.0
    %69 = vmatpush1.msra.mxu0 0.0
    %70 = vmatprep.subr.mxu0 0.0
    %71 = vmatpush1.msra.mxu0 0.0
    %72 = vmatprep.subr.mxu0 0.0
    %73 = vmatpush1.msra.mxu0 0.0
    %74 = vmatprep.subr.mxu0 0.0
    %75 = vmatpush1.msra.mxu0 0.0
    %76 = vmatprep.subr.mxu0 0.0
    %77 = vmatpush1.msra.mxu0 0.0
    %78 = vmatprep.subr.mxu0 0.0
    %79 = vmatpush1.msra.mxu0 0.0
    %80 = vmatprep.subr.mxu0 0.0
    %81 = vmatpush1.msra.mxu0 0.0
    %82 = vmatprep.subr.mxu0 0.0
    %83 = vmatpush1.msra.mxu0 0.0
    %84 = vmatprep.subr.mxu0 0.0
    %85 = vmatpush1.msra.mxu0 0.0
    %86 = vmatprep.subr.mxu0 0.0
    %87 = vmatpush1.msra.mxu0 0.0
    %88 = vmatprep.subr.mxu0 0.0
    %89 = vmatpush1.msra.mxu0 0.0
    %90 = vmatprep.subr.mxu0 0.0
    %91 = vmatpush1.msra.mxu0 0.0
    %92 = vmatprep.subr.mxu0 0.0
    %93 = vmatpush1.msra.mxu0 0.0
    %94 = vmatprep.subr.mxu0 0.0
    %95 = vmatpush1.msra.mxu0 0.0
    %96 = vmatprep.subr.mxu0 0.0
    %97 = vmatpush1.msra.mxu0 0.0
    %98 = vmatprep.subr.mxu0 0.0
    %99 = vmatpush1.msra.mxu0 0.0
    %100 = vmatprep.subr.mxu0 0.0
    %101 = vmatpush1.msra.mxu0 0.0
    %102 = vmatprep.subr.mxu0 0.0
    %103 = vmatpush1.msra.mxu0 0.0
    %104 = vmatprep.subr.mxu0 0.0
    %105 = vmatpush1.msra.mxu0 0.0
    %106 = vmatprep.subr.mxu0 0.0
    %107 = vmatpush1.msra.mxu0 0.0
    %108 = vmatprep.subr.mxu0 0.0
    %109 = vmatpush1.msra.mxu0 0.0
    %110 = vmatprep.mubr.f32.mxu0 0.0
    %111 = vmatmul.mubr.f32.gmra.mrb[0].mxu0 %v37
    %v112 = vpop.f32.mrb[0].mxu0
    %v113 = vadd.f32 %v33, %v112
    %v114 = vpop.f32.mrb[0].mxu0
    %115 = vmatprep.mubr.f32.mxu0 0.0
    %116 = vmatmul.mubr.f32.gmra.mrb[0].mxu0 %v40
    %v117 = vpop.f32.mrb[0].mxu0
    %v118 = vadd.f32 %v33, %v117
    %v119 = vpop.f32.mrb[0].mxu0
    %120 = vdwg.mxu0
    %v121 = vld [vmem:[%s2] sm:$0xf]
    %v122 = vld [vmem:[%s2 + $0x4] sm:$0xf]
    %v123 = vld [vmem:[%s2 + $0x8] sm:$0xf]
    %v124 = vld [vmem:[%s2 + $0xc] sm:$0xf]
    %v129 = vunpack.c.l.b16 %v121
    %v130 = vunpack.c.l.b16 %v122
    %v131 = vunpack.c.l.b16 %v123
    %v132 = vunpack.c.l.b16 %v124
    %v133 = vpack.c.b16 %v130, %v129
    %v134 = vpack.c.b16 %v132, %v131
    %vm137 = vcmask 261120
    %v139 = vsel %vm137, 0, 0
    %141 = vmatprep.subr.bf16.mxu0 0
    %142 = vmatpush1.bf16.msra.mxu0 %v133
    %143 = vmatprep.subr.bf16.mxu0 0
    %144 = vmatpush1.bf16.msra.mxu0 %v134
    %145 = vmatprep.subr.bf16.mxu0 0
    %146 = vmatpush1.bf16.msra.mxu0 0
    %147 = vmatprep.subr.bf16.mxu0 0
    %148 = vmatpush1.bf16.msra.mxu0 0
    %149 = vmatprep.subr.bf16.mxu0 0
    %150 = vmatpush1.bf16.msra.mxu0 0
    %151 = vmatprep.subr.bf16.mxu0 0
    %152 = vmatpush1.bf16.msra.mxu0 0
    %153 = vmatprep.subr.bf16.mxu0 0
    %154 = vmatpush1.bf16.msra.mxu0 0
    %155 = vmatprep.subr.bf16.mxu0 0
    %156 = vmatpush1.bf16.msra.mxu0 0
    %157 = vmatprep.subr.bf16.mxu0 0
    %158 = vmatpush1.bf16.msra.mxu0 0
    %159 = vmatprep.subr.bf16.mxu0 0
    %160 = vmatpush1.bf16.msra.mxu0 0
    %161 = vmatprep.subr.bf16.mxu0 0
    %162 = vmatpush1.bf16.msra.mxu0 0
    %163 = vmatprep.subr.bf16.mxu0 0
    %164 = vmatpush1.bf16.msra.mxu0 0
    %165 = vmatprep.subr.bf16.mxu0 0
    %166 = vmatpush1.bf16.msra.mxu0 0
    %167 = vmatprep.subr.bf16.mxu0 0
    %168 = vmatpush1.bf16.msra.mxu0 0
    %169 = vmatprep.subr.bf16.mxu0 0
    %170 = vmatpush1.bf16.msra.mxu0 0
    %171 = vmatprep.subr.bf16.mxu0 0
    %172 = vmatpush1.bf16.msra.mxu0 0
    %173 = vmatprep.mubr.bf16.mxu0 0
    %174 = vmatmul.mubr.bf16.gmra.mrb[0].mxu0 %v139
    %v175 = vpop.f32.mrb[0].mxu0
    %v176 = vadd.f32 0.0, %v175
    %v177 = vpop.f32.mrb[0].mxu0
    %v178 = vpop.f32.mrb[0].mxu0
    %v179 = vpop.f32.mrb[0].mxu0
    %180 = vdwg.mxu0
    %v182 = vrot.slane %v176, 1
    %v185 = vadd.f32 %v113, %v176
    %v186 = vadd.f32 %v118, %v182
    %v187 = vxor.u32 %v185, 2147483648
    %v188 = vxor.u32 %v186, 2147483648
    %v189 = vmul.f32 %v187, 1.442695
    %v190 = vpow.pop %v189
    %v191 = vmul.f32 %v188, 1.442695
    %v192 = vpow.pop %v191
    %v193 = vadd.f32 %v190, 1.0
    %v194 = vadd.f32 %v192, 1.0
    %v195 = vrcp.pop %v193
    %v196 = vmul.f32 1.0, %v195
    %v197 = vrcp.pop %v194
    %v198 = vmul.f32 1.0, %v197
    %v199 = vtanh.pop %v185
    %v200 = vtanh.pop %v186
    %v201 = vmul.f32 %v196, 0.0
    %v202 = vmul.f32 %v198, 0.0
    %205 = vrot.lane.b32.xlu0 %v199, 64
    %v206 = vpop.permute.xlu0 %205
    %207 = vrot.lane.b32.xlu0 %v200, 64
    %v208 = vpop.permute.xlu0 %207
    %v211 = vmul.f32 %v196, %v206
    %v212 = vmul.f32 %v198, %v208
    %215 = vrot.lane.b32.xlu0 %v211, 32
    %v216 = vpop.permute.xlu0 %215
    %217 = vrot.lane.b32.xlu0 %v212, 32
    %v218 = vpop.permute.xlu0 %217
    %v221 = vadd.f32 %v201, %v216
    %v222 = vadd.f32 %v202, %v218
    %v223 = vtanh.pop %v221
    %v224 = vtanh.pop %v222
    %227 = vrot.lane.b32.xlu0 %v223, 64
    %v228 = vpop.permute.xlu0 %227
    %229 = vrot.lane.b32.xlu0 %v224, 64
    %v230 = vpop.permute.xlu0 %229
    %v233 = vmul.f32 %v196, %v228
    %v234 = vmul.f32 %v198, %v230
    %v235 = vpack.c.bf16 %v233, %v233
    %v236 = vpack.c.bf16 %v234, %v234
    %v239 = vunpack.c.l.b16 %v235
    %v240 = vunpack.c.l.b16 %v236
    %v241 = vrot.slane %v240, 7
    %vm242 = vcmask 1041409
    %v243 = vsel %vm242, %v241, %v239
    %v244 = vpack.c.b16 %v243, %v243
    %245 = vrot.lane.b32.xlu0 %v244, 32
    %v246 = vpop.permute.xlu0 %245
    %v248 = vsel %vm137, %v246, 0
    %250 = vmatprep.subr.bf16.mxu0 0
    %251 = vmatpush1.bf16.msra.mxu0 %v133
    %252 = vmatprep.subr.bf16.mxu0 0
    %253 = vmatpush1.bf16.msra.mxu0 %v134
    %254 = vmatprep.subr.bf16.mxu0 0
    %255 = vmatpush1.bf16.msra.mxu0 0
    %256 = vmatprep.subr.bf16.mxu0 0
    %257 = vmatpush1.bf16.msra.mxu0 0
    %258 = vmatprep.subr.bf16.mxu0 0
    %259 = vmatpush1.bf16.msra.mxu0 0
    %260 = vmatprep.subr.bf16.mxu0 0
    %261 = vmatpush1.bf16.msra.mxu0 0
    %262 = vmatprep.subr.bf16.mxu0 0
    %263 = vmatpush1.bf16.msra.mxu0 0
    %264 = vmatprep.subr.bf16.mxu0 0
    %265 = vmatpush1.bf16.msra.mxu0 0
    %266 = vmatprep.subr.bf16.mxu0 0
    %267 = vmatpush1.bf16.msra.mxu0 0
    %268 = vmatprep.subr.bf16.mxu0 0
    %269 = vmatpush1.bf16.msra.mxu0 0
    %270 = vmatprep.subr.bf16.mxu0 0
    %271 = vmatpush1.bf16.msra.mxu0 0
    %272 = vmatprep.subr.bf16.mxu0 0
    %273 = vmatpush1.bf16.msra.mxu0 0
    %274 = vmatprep.subr.bf16.mxu0 0
    %275 = vmatpush1.bf16.msra.mxu0 0
    %276 = vmatprep.subr.bf16.mxu0 0
    %277 = vmatpush1.bf16.msra.mxu0 0
    %278 = vmatprep.subr.bf16.mxu0 0
    %279 = vmatpush1.bf16.msra.mxu0 0
    %280 = vmatprep.subr.bf16.mxu0 0
    %281 = vmatpush1.bf16.msra.mxu0 0
    %282 = vmatprep.mubr.bf16.mxu0 0
    %283 = vmatmul.mubr.bf16.gmra.mrb[0].mxu0 %v248
    %v284 = vpop.f32.mrb[0].mxu0
    %v285 = vadd.f32 0.0, %v284
    %v286 = vpop.f32.mrb[0].mxu0
    %v287 = vpop.f32.mrb[0].mxu0
    %v288 = vpop.f32.mrb[0].mxu0
    %289 = vdwg.mxu0
    %v291 = vrot.slane %v285, 7
    %v294 = vadd.f32 %v113, %v291
    %v295 = vadd.f32 %v118, %v285
    %v296 = vxor.u32 %v294, 2147483648
    %v297 = vxor.u32 %v295, 2147483648
    %v298 = vmul.f32 %v296, 1.442695
    %v299 = vpow.pop %v298
    %v300 = vmul.f32 %v297, 1.442695
    %v301 = vpow.pop %v300
    %v302 = vadd.f32 %v299, 1.0
    %v303 = vadd.f32 %v301, 1.0
    %v304 = vrcp.pop %v302
    %v305 = vmul.f32 1.0, %v304
    %v306 = vrcp.pop %v303
    %v307 = vmul.f32 1.0, %v306
    %v308 = vtanh.pop %v294
    %v309 = vtanh.pop %v295
    %v312 = vrot.slane %v221, 7
    %v313 = vrot.slane %v222, 7
    %v316 = vmul.f32 %v305, %v312
    %v317 = vmul.f32 %v307, %v313
    %320 = vrot.lane.b32.xlu0 %v308, 64
    %v321 = vpop.permute.xlu0 %320
    %322 = vrot.lane.b32.xlu0 %v309, 64
    %v323 = vpop.permute.xlu0 %322
    %v326 = vmul.f32 %v305, %v321
    %v327 = vmul.f32 %v307, %v323
    %330 = vrot.lane.b32.xlu0 %v326, 32
    %v331 = vpop.permute.xlu0 %330
    %332 = vrot.lane.b32.xlu0 %v327, 32
    %v333 = vpop.permute.xlu0 %332
    %v336 = vadd.f32 %v316, %v331
    %v337 = vadd.f32 %v317, %v333
    %v338 = vtanh.pop %v336
    %v339 = vtanh.pop %v337
    %342 = vrot.lane.b32.xlu0 %v338, 64
    %v343 = vpop.permute.xlu0 %342
    %344 = vrot.lane.b32.xlu0 %v339, 64
    %v345 = vpop.permute.xlu0 %344
    %v348 = vmul.f32 %v305, %v343
    %v349 = vmul.f32 %v307, %v345
    %v350 = vpack.c.bf16 %v348, %v348
    %v351 = vpack.c.bf16 %v349, %v349
    %v354 = vunpack.c.l.b16 %v350
    %v355 = vunpack.c.l.b16 %v351
    %v356 = vrot.slane %v354, 1
    %v357 = vsel %vm242, %v355, %v356
    %v358 = vpack.c.b16 %v357, %v357
    %359 = vrot.lane.b32.xlu0 %v358, 32
    %v360 = vpop.permute.xlu0 %359
    %v362 = vsel %vm137, %v360, 0
    %364 = vmatprep.subr.bf16.mxu0 0
    %365 = vmatpush1.bf16.msra.mxu0 %v133
    %366 = vmatprep.subr.bf16.mxu0 0
    %367 = vmatpush1.bf16.msra.mxu0 %v134
    %368 = vmatprep.subr.bf16.mxu0 0
    %369 = vmatpush1.bf16.msra.mxu0 0
    %370 = vmatprep.subr.bf16.mxu0 0
    %371 = vmatpush1.bf16.msra.mxu0 0
    %372 = vmatprep.subr.bf16.mxu0 0
    %373 = vmatpush1.bf16.msra.mxu0 0
    %374 = vmatprep.subr.bf16.mxu0 0
    %375 = vmatpush1.bf16.msra.mxu0 0
    %376 = vmatprep.subr.bf16.mxu0 0
    %377 = vmatpush1.bf16.msra.mxu0 0
    %378 = vmatprep.subr.bf16.mxu0 0
    %379 = vmatpush1.bf16.msra.mxu0 0
    %380 = vmatprep.subr.bf16.mxu0 0
    %381 = vmatpush1.bf16.msra.mxu0 0
    %382 = vmatprep.subr.bf16.mxu0 0
    %383 = vmatpush1.bf16.msra.mxu0 0
    %384 = vmatprep.subr.bf16.mxu0 0
    %385 = vmatpush1.bf16.msra.mxu0 0
    %386 = vmatprep.subr.bf16.mxu0 0
    %387 = vmatpush1.bf16.msra.mxu0 0
    %388 = vmatprep.subr.bf16.mxu0 0
    %389 = vmatpush1.bf16.msra.mxu0 0
    %390 = vmatprep.subr.bf16.mxu0 0
    %391 = vmatpush1.bf16.msra.mxu0 0
    %392 = vmatprep.subr.bf16.mxu0 0
    %393 = vmatpush1.bf16.msra.mxu0 0
    %394 = vmatprep.subr.bf16.mxu0 0
    %395 = vmatpush1.bf16.msra.mxu0 0
    %396 = vmatprep.mubr.bf16.mxu0 0
    %397 = vmatmul.mubr.bf16.gmra.mrb[0].mxu0 %v362
    %v398 = vpop.f32.mrb[0].mxu0
    %v399 = vadd.f32 0.0, %v398
    %v400 = vpop.f32.mrb[0].mxu0
    %v401 = vpop.f32.mrb[0].mxu0
    %v402 = vpop.f32.mrb[0].mxu0
    %403 = vdwg.mxu0
    %v405 = vrot.slane %v399, 6
    %v406 = vrot.slane %v399, 7
    %v409 = vadd.f32 %v113, %v405
    %v410 = vadd.f32 %v118, %v406
    %v411 = vxor.u32 %v409, 2147483648
    %v412 = vxor.u32 %v410, 2147483648
    %v413 = vmul.f32 %v411, 1.442695
    %v414 = vpow.pop %v413
    %v415 = vmul.f32 %v412, 1.442695
    %v416 = vpow.pop %v415
    %v417 = vadd.f32 %v414, 1.0
    %v418 = vadd.f32 %v416, 1.0
    %v419 = vrcp.pop %v417
    %v420 = vmul.f32 1.0, %v419
    %v421 = vrcp.pop %v418
    %v422 = vmul.f32 1.0, %v421
    %v423 = vtanh.pop %v409
    %v424 = vtanh.pop %v410
    %v427 = vrot.slane %v336, 7
    %v428 = vrot.slane %v337, 7
    %v431 = vmul.f32 %v420, %v427
    %v432 = vmul.f32 %v422, %v428
    %435 = vrot.lane.b32.xlu0 %v423, 64
    %v436 = vpop.permute.xlu0 %435
    %437 = vrot.lane.b32.xlu0 %v424, 64
    %v438 = vpop.permute.xlu0 %437
    %v441 = vmul.f32 %v420, %v436
    %v442 = vmul.f32 %v422, %v438
    %445 = vrot.lane.b32.xlu0 %v441, 32
    %v446 = vpop.permute.xlu0 %445
    %447 = vrot.lane.b32.xlu0 %v442, 32
    %v448 = vpop.permute.xlu0 %447
    %v451 = vadd.f32 %v431, %v446
    %v452 = vadd.f32 %v432, %v448
    %v453 = vtanh.pop %v451
    %v454 = vtanh.pop %v452
    %457 = vrot.lane.b32.xlu0 %v453, 64
    %v458 = vpop.permute.xlu0 %457
    %459 = vrot.lane.b32.xlu0 %v454, 64
    %v460 = vpop.permute.xlu0 %459
    %v463 = vmul.f32 %v420, %v458
    %v464 = vmul.f32 %v422, %v460
    %v465 = vpack.c.bf16 %v463, %v463
    %v466 = vpack.c.bf16 %v464, %v464
    %v469 = vunpack.c.l.b16 %v465
    %v470 = vunpack.c.l.b16 %v466
    %v471 = vrot.slane %v469, 2
    %v472 = vrot.slane %v470, 1
    %v473 = vsel %vm242, %v472, %v471
    %v474 = vpack.c.b16 %v473, %v473
    %475 = vrot.lane.b32.xlu0 %v474, 32
    %v476 = vpop.permute.xlu0 %475
    %v478 = vsel %vm137, %v476, 0
    %480 = vmatprep.subr.bf16.mxu0 0
    %481 = vmatpush1.bf16.msra.mxu0 %v133
    %482 = vmatprep.subr.bf16.mxu0 0
    %483 = vmatpush1.bf16.msra.mxu0 %v134
    %484 = vmatprep.subr.bf16.mxu0 0
    %485 = vmatpush1.bf16.msra.mxu0 0
    %486 = vmatprep.subr.bf16.mxu0 0
    %487 = vmatpush1.bf16.msra.mxu0 0
    %488 = vmatprep.subr.bf16.mxu0 0
    %489 = vmatpush1.bf16.msra.mxu0 0
    %490 = vmatprep.subr.bf16.mxu0 0
    %491 = vmatpush1.bf16.msra.mxu0 0
    %492 = vmatprep.subr.bf16.mxu0 0
    %493 = vmatpush1.bf16.msra.mxu0 0
    %494 = vmatprep.subr.bf16.mxu0 0
    %495 = vmatpush1.bf16.msra.mxu0 0
    %496 = vmatprep.subr.bf16.mxu0 0
    %497 = vmatpush1.bf16.msra.mxu0 0
    %498 = vmatprep.subr.bf16.mxu0 0
    %499 = vmatpush1.bf16.msra.mxu0 0
    %500 = vmatprep.subr.bf16.mxu0 0
    %501 = vmatpush1.bf16.msra.mxu0 0
    %502 = vmatprep.subr.bf16.mxu0 0
    %503 = vmatpush1.bf16.msra.mxu0 0
    %504 = vmatprep.subr.bf16.mxu0 0
    %505 = vmatpush1.bf16.msra.mxu0 0
    %506 = vmatprep.subr.bf16.mxu0 0
    %507 = vmatpush1.bf16.msra.mxu0 0
    %508 = vmatprep.subr.bf16.mxu0 0
    %509 = vmatpush1.bf16.msra.mxu0 0
    %510 = vmatprep.subr.bf16.mxu0 0
    %511 = vmatpush1.bf16.msra.mxu0 0
    %512 = vmatprep.mubr.bf16.mxu0 0
    %513 = vmatmul.mubr.bf16.gmra.mrb[0].mxu0 %v478
    %v514 = vpop.f32.mrb[0].mxu0
    %v515 = vadd.f32 0.0, %v514
    %v516 = vpop.f32.mrb[0].mxu0
    %v517 = vpop.f32.mrb[0].mxu0
    %v518 = vpop.f32.mrb[0].mxu0
    %519 = vdwg.mxu0
    %v521 = vrot.slane %v515, 5
    %v522 = vrot.slane %v515, 6
    %v525 = vadd.f32 %v113, %v521
    %v526 = vadd.f32 %v118, %v522
    %v527 = vxor.u32 %v525, 2147483648
    %v528 = vxor.u32 %v526, 2147483648
    %v529 = vmul.f32 %v527, 1.442695
    %v530 = vpow.pop %v529
    %v531 = vmul.f32 %v528, 1.442695
    %v532 = vpow.pop %v531
    %v533 = vadd.f32 %v530, 1.0
    %v534 = vadd.f32 %v532, 1.0
    %v535 = vrcp.pop %v533
    %v536 = vmul.f32 1.0, %v535
    %v537 = vrcp.pop %v534
    %v538 = vmul.f32 1.0, %v537
    %v539 = vtanh.pop %v525
    %v540 = vtanh.pop %v526
    %v543 = vrot.slane %v451, 7
    %v544 = vrot.slane %v452, 7
    %v547 = vmul.f32 %v536, %v543
    %v548 = vmul.f32 %v538, %v544
    %551 = vrot.lane.b32.xlu0 %v539, 64
    %v552 = vpop.permute.xlu0 %551
    %553 = vrot.lane.b32.xlu0 %v540, 64
    %v554 = vpop.permute.xlu0 %553
    %v557 = vmul.f32 %v536, %v552
    %v558 = vmul.f32 %v538, %v554
    %561 = vrot.lane.b32.xlu0 %v557, 32
    %v562 = vpop.permute.xlu0 %561
    %563 = vrot.lane.b32.xlu0 %v558, 32
    %v564 = vpop.permute.xlu0 %563
    %v567 = vadd.f32 %v547, %v562
    %v568 = vadd.f32 %v548, %v564
    %v569 = vtanh.pop %v567
    %v570 = vtanh.pop %v568
    %573 = vrot.lane.b32.xlu0 %v569, 64
    %v574 = vpop.permute.xlu0 %573
    %575 = vrot.lane.b32.xlu0 %v570, 64
    %v576 = vpop.permute.xlu0 %575
    %v579 = vmul.f32 %v536, %v574
    %v580 = vmul.f32 %v538, %v576
    %v581 = vpack.c.bf16 %v579, %v579
    %v582 = vpack.c.bf16 %v580, %v580
    %v585 = vunpack.c.l.b16 %v581
    %v586 = vunpack.c.l.b16 %v582
    %v587 = vrot.slane %v585, 3
    %v588 = vrot.slane %v586, 2
    %v589 = vsel %vm242, %v588, %v587
    %v590 = vpack.c.b16 %v589, %v589
    %591 = vrot.lane.b32.xlu0 %v590, 32
    %v592 = vpop.permute.xlu0 %591
    %v594 = vsel %vm137, %v592, 0
    %596 = vmatprep.subr.bf16.mxu0 0
    %597 = vmatpush1.bf16.msra.mxu0 %v133
    %598 = vmatprep.subr.bf16.mxu0 0
    %599 = vmatpush1.bf16.msra.mxu0 %v134
    %600 = vmatprep.subr.bf16.mxu0 0
    %601 = vmatpush1.bf16.msra.mxu0 0
    %602 = vmatprep.subr.bf16.mxu0 0
    %603 = vmatpush1.bf16.msra.mxu0 0
    %604 = vmatprep.subr.bf16.mxu0 0
    %605 = vmatpush1.bf16.msra.mxu0 0
    %606 = vmatprep.subr.bf16.mxu0 0
    %607 = vmatpush1.bf16.msra.mxu0 0
    %608 = vmatprep.subr.bf16.mxu0 0
    %609 = vmatpush1.bf16.msra.mxu0 0
    %610 = vmatprep.subr.bf16.mxu0 0
    %611 = vmatpush1.bf16.msra.mxu0 0
    %612 = vmatprep.subr.bf16.mxu0 0
    %613 = vmatpush1.bf16.msra.mxu0 0
    %614 = vmatprep.subr.bf16.mxu0 0
    %615 = vmatpush1.bf16.msra.mxu0 0
    %616 = vmatprep.subr.bf16.mxu0 0
    %617 = vmatpush1.bf16.msra.mxu0 0
    %618 = vmatprep.subr.bf16.mxu0 0
    %619 = vmatpush1.bf16.msra.mxu0 0
    %620 = vmatprep.subr.bf16.mxu0 0
    %621 = vmatpush1.bf16.msra.mxu0 0
    %622 = vmatprep.subr.bf16.mxu0 0
    %623 = vmatpush1.bf16.msra.mxu0 0
    %624 = vmatprep.subr.bf16.mxu0 0
    %625 = vmatpush1.bf16.msra.mxu0 0
    %626 = vmatprep.subr.bf16.mxu0 0
    %627 = vmatpush1.bf16.msra.mxu0 0
    %628 = vmatprep.mubr.bf16.mxu0 0
    %629 = vmatmul.mubr.bf16.gmra.mrb[0].mxu0 %v594
    %v630 = vpop.f32.mrb[0].mxu0
    %v631 = vadd.f32 0.0, %v630
    %v632 = vpop.f32.mrb[0].mxu0
    %v633 = vpop.f32.mrb[0].mxu0
    %v634 = vpop.f32.mrb[0].mxu0
    %635 = vdwg.mxu0
    %v637 = vrot.slane %v631, 4
    %v638 = vrot.slane %v631, 5
    %v641 = vadd.f32 %v113, %v637
    %v642 = vadd.f32 %v118, %v638
    %v643 = vxor.u32 %v641, 2147483648
    %v644 = vxor.u32 %v642, 2147483648
    %v645 = vmul.f32 %v643, 1.442695
    %v646 = vpow.pop %v645
    %v647 = vmul.f32 %v644, 1.442695
    %v648 = vpow.pop %v647
    %v649 = vadd.f32 %v646, 1.0
    %v650 = vadd.f32 %v648, 1.0
    %v651 = vrcp.pop %v649
    %v652 = vmul.f32 1.0, %v651
    %v653 = vrcp.pop %v650
    %v654 = vmul.f32 1.0, %v653
    %v655 = vtanh.pop %v641
    %v656 = vtanh.pop %v642
    %v659 = vrot.slane %v567, 7
    %v660 = vrot.slane %v568, 7
    %v663 = vmul.f32 %v652, %v659
    %v664 = vmul.f32 %v654, %v660
    %667 = vrot.lane.b32.xlu0 %v655, 64
    %v668 = vpop.permute.xlu0 %667
    %669 = vrot.lane.b32.xlu0 %v656, 64
    %v670 = vpop.permute.xlu0 %669
    %v673 = vmul.f32 %v652, %v668
    %v674 = vmul.f32 %v654, %v670
    %677 = vrot.lane.b32.xlu0 %v673, 32
    %v678 = vpop.permute.xlu0 %677
    %679 = vrot.lane.b32.xlu0 %v674, 32
    %v680 = vpop.permute.xlu0 %679
    %v683 = vadd.f32 %v663, %v678
    %v684 = vadd.f32 %v664, %v680
    %v685 = vtanh.pop %v683
    %v686 = vtanh.pop %v684
    %689 = vrot.lane.b32.xlu0 %v685, 64
    %v690 = vpop.permute.xlu0 %689
    %691 = vrot.lane.b32.xlu0 %v686, 64
    %v692 = vpop.permute.xlu0 %691
    %v695 = vmul.f32 %v652, %v690
    %v696 = vmul.f32 %v654, %v692
    %v697 = vpack.c.bf16 %v695, %v695
    %v698 = vpack.c.bf16 %v696, %v696
    %v701 = vunpack.c.l.b16 %v697
    %v702 = vunpack.c.l.b16 %v698
    %v703 = vrot.slane %v701, 4
    %v704 = vrot.slane %v702, 3
    %v705 = vsel %vm242, %v704, %v703
    %v706 = vpack.c.b16 %v705, %v705
    %707 = vrot.lane.b32.xlu0 %v706, 32
    %v708 = vpop.permute.xlu0 %707
    %v710 = vsel %vm137, %v708, 0
    %712 = vmatprep.subr.bf16.mxu0 0
    %713 = vmatpush1.bf16.msra.mxu0 %v133
    %714 = vmatprep.subr.bf16.mxu0 0
    %715 = vmatpush1.bf16.msra.mxu0 %v134
    %716 = vmatprep.subr.bf16.mxu0 0
    %717 = vmatpush1.bf16.msra.mxu0 0
    %718 = vmatprep.subr.bf16.mxu0 0
    %719 = vmatpush1.bf16.msra.mxu0 0
    %720 = vmatprep.subr.bf16.mxu0 0
    %721 = vmatpush1.bf16.msra.mxu0 0
    %722 = vmatprep.subr.bf16.mxu0 0
    %723 = vmatpush1.bf16.msra.mxu0 0
    %724 = vmatprep.subr.bf16.mxu0 0
    %725 = vmatpush1.bf16.msra.mxu0 0
    %726 = vmatprep.subr.bf16.mxu0 0
    %727 = vmatpush1.bf16.msra.mxu0 0
    %728 = vmatprep.subr.bf16.mxu0 0
    %729 = vmatpush1.bf16.msra.mxu0 0
    %730 = vmatprep.subr.bf16.mxu0 0
    %731 = vmatpush1.bf16.msra.mxu0 0
    %732 = vmatprep.subr.bf16.mxu0 0
    %733 = vmatpush1.bf16.msra.mxu0 0
    %734 = vmatprep.subr.bf16.mxu0 0
    %735 = vmatpush1.bf16.msra.mxu0 0
    %736 = vmatprep.subr.bf16.mxu0 0
    %737 = vmatpush1.bf16.msra.mxu0 0
    %738 = vmatprep.subr.bf16.mxu0 0
    %739 = vmatpush1.bf16.msra.mxu0 0
    %740 = vmatprep.subr.bf16.mxu0 0
    %741 = vmatpush1.bf16.msra.mxu0 0
    %742 = vmatprep.subr.bf16.mxu0 0
    %743 = vmatpush1.bf16.msra.mxu0 0
    %744 = vmatprep.mubr.bf16.mxu0 0
    %745 = vmatmul.mubr.bf16.gmra.mrb[0].mxu0 %v710
    %v746 = vpop.f32.mrb[0].mxu0
    %v747 = vadd.f32 0.0, %v746
    %v748 = vpop.f32.mrb[0].mxu0
    %v749 = vpop.f32.mrb[0].mxu0
    %v750 = vpop.f32.mrb[0].mxu0
    %751 = vdwg.mxu0
    %v753 = vrot.slane %v747, 3
    %v754 = vrot.slane %v747, 4
    %v757 = vadd.f32 %v113, %v753
    %v758 = vadd.f32 %v118, %v754
    %v759 = vxor.u32 %v757, 2147483648
    %v760 = vxor.u32 %v758, 2147483648
    %v761 = vmul.f32 %v759, 1.442695
    %v762 = vpow.pop %v761
    %v763 = vmul.f32 %v760, 1.442695
    %v764 = vpow.pop %v763
    %v765 = vadd.f32 %v762, 1.0
    %v766 = vadd.f32 %v764, 1.0
    %v767 = vrcp.pop %v765
    %v768 = vmul.f32 1.0, %v767
    %v769 = vrcp.pop %v766
    %v770 = vmul.f32 1.0, %v769
    %v771 = vtanh.pop %v757
    %v772 = vtanh.pop %v758
    %v775 = vrot.slane %v683, 7
    %v776 = vrot.slane %v684, 7
    %v779 = vmul.f32 %v768, %v775
    %v780 = vmul.f32 %v770, %v776
    %783 = vrot.lane.b32.xlu0 %v771, 64
    %v784 = vpop.permute.xlu0 %783
    %785 = vrot.lane.b32.xlu0 %v772, 64
    %v786 = vpop.permute.xlu0 %785
    %v789 = vmul.f32 %v768, %v784
    %v790 = vmul.f32 %v770, %v786
    %793 = vrot.lane.b32.xlu0 %v789, 32
    %v794 = vpop.permute.xlu0 %793
    %795 = vrot.lane.b32.xlu0 %v790, 32
    %v796 = vpop.permute.xlu0 %795
    %v799 = vadd.f32 %v779, %v794
    %v800 = vadd.f32 %v780, %v796
    %v801 = vtanh.pop %v799
    %v802 = vtanh.pop %v800
    %805 = vrot.lane.b32.xlu0 %v801, 64
    %v806 = vpop.permute.xlu0 %805
    %807 = vrot.lane.b32.xlu0 %v802, 64
    %v808 = vpop.permute.xlu0 %807
    %v811 = vmul.f32 %v768, %v806
    %v812 = vmul.f32 %v770, %v808
    %v813 = vpack.c.bf16 %v811, %v811
    %v814 = vpack.c.bf16 %v812, %v812
    %v817 = vunpack.c.l.b16 %v813
    %v818 = vunpack.c.l.b16 %v814
    %v819 = vrot.slane %v817, 5
    %v820 = vrot.slane %v818, 4
    %v821 = vsel %vm242, %v820, %v819
    %v822 = vpack.c.b16 %v821, %v821
    %823 = vrot.lane.b32.xlu0 %v822, 32
    %v824 = vpop.permute.xlu0 %823
    %v826 = vsel %vm137, %v824, 0
    %828 = vmatprep.subr.bf16.mxu0 0
    %829 = vmatpush1.bf16.msra.mxu0 %v133
    %830 = vmatprep.subr.bf16.mxu0 0
    %831 = vmatpush1.bf16.msra.mxu0 %v134
    %832 = vmatprep.subr.bf16.mxu0 0
    %833 = vmatpush1.bf16.msra.mxu0 0
    %834 = vmatprep.subr.bf16.mxu0 0
    %835 = vmatpush1.bf16.msra.mxu0 0
    %836 = vmatprep.subr.bf16.mxu0 0
    %837 = vmatpush1.bf16.msra.mxu0 0
    %838 = vmatprep.subr.bf16.mxu0 0
    %839 = vmatpush1.bf16.msra.mxu0 0
    %840 = vmatprep.subr.bf16.mxu0 0
    %841 = vmatpush1.bf16.msra.mxu0 0
    %842 = vmatprep.subr.bf16.mxu0 0
    %843 = vmatpush1.bf16.msra.mxu0 0
    %844 = vmatprep.subr.bf16.mxu0 0
    %845 = vmatpush1.bf16.msra.mxu0 0
    %846 = vmatprep.subr.bf16.mxu0 0
    %847 = vmatpush1.bf16.msra.mxu0 0
    %848 = vmatprep.subr.bf16.mxu0 0
    %849 = vmatpush1.bf16.msra.mxu0 0
    %850 = vmatprep.subr.bf16.mxu0 0
    %851 = vmatpush1.bf16.msra.mxu0 0
    %852 = vmatprep.subr.bf16.mxu0 0
    %853 = vmatpush1.bf16.msra.mxu0 0
    %854 = vmatprep.subr.bf16.mxu0 0
    %855 = vmatpush1.bf16.msra.mxu0 0
    %856 = vmatprep.subr.bf16.mxu0 0
    %857 = vmatpush1.bf16.msra.mxu0 0
    %858 = vmatprep.subr.bf16.mxu0 0
    %859 = vmatpush1.bf16.msra.mxu0 0
    %860 = vmatprep.mubr.bf16.mxu0 0
    %861 = vmatmul.mubr.bf16.gmra.mrb[0].mxu0 %v826
    %v862 = vpop.f32.mrb[0].mxu0
    %v863 = vadd.f32 0.0, %v862
    %v864 = vpop.f32.mrb[0].mxu0
    %v865 = vpop.f32.mrb[0].mxu0
    %v866 = vpop.f32.mrb[0].mxu0
    %867 = vdwg.mxu0
    %v869 = vrot.slane %v863, 2
    %v870 = vrot.slane %v863, 3
    %v873 = vadd.f32 %v113, %v869
    %v874 = vadd.f32 %v118, %v870
    %v875 = vxor.u32 %v873, 2147483648
    %v876 = vxor.u32 %v874, 2147483648
    %v877 = vmul.f32 %v875, 1.442695
    %v878 = vpow.pop %v877
    %v879 = vmul.f32 %v876, 1.442695
    %v880 = vpow.pop %v879
    %v881 = vadd.f32 %v878, 1.0
    %v882 = vadd.f32 %v880, 1.0
    %v883 = vrcp.pop %v881
    %v884 = vmul.f32 1.0, %v883
    %v885 = vrcp.pop %v882
    %v886 = vmul.f32 1.0, %v885
    %v887 = vtanh.pop %v873
    %v888 = vtanh.pop %v874
    %v891 = vrot.slane %v799, 7
    %v892 = vrot.slane %v800, 7
    %v895 = vmul.f32 %v884, %v891
    %v896 = vmul.f32 %v886, %v892
    %899 = vrot.lane.b32.xlu0 %v887, 64
    %v900 = vpop.permute.xlu0 %899
    %901 = vrot.lane.b32.xlu0 %v888, 64
    %v902 = vpop.permute.xlu0 %901
    %v905 = vmul.f32 %v884, %v900
    %v906 = vmul.f32 %v886, %v902
    %909 = vrot.lane.b32.xlu0 %v905, 32
    %v910 = vpop.permute.xlu0 %909
    %911 = vrot.lane.b32.xlu0 %v906, 32
    %v912 = vpop.permute.xlu0 %911
    %v915 = vadd.f32 %v895, %v910
    %v916 = vadd.f32 %v896, %v912
    %v917 = vtanh.pop %v915
    %v918 = vtanh.pop %v916
    %921 = vrot.lane.b32.xlu0 %v917, 64
    %v922 = vpop.permute.xlu0 %921
    %923 = vrot.lane.b32.xlu0 %v918, 64
    %v924 = vpop.permute.xlu0 %923
    %v927 = vmul.f32 %v884, %v922
    %v928 = vmul.f32 %v886, %v924
    %v929 = vpack.c.bf16 %v927, %v927
    %v930 = vpack.c.bf16 %v928, %v928
    %v933 = vunpack.c.l.b16 %v929
    %v934 = vunpack.c.l.b16 %v930
    %v935 = vrot.slane %v933, 6
    %v936 = vrot.slane %v934, 5
    %v937 = vsel %vm242, %v936, %v935
    %v938 = vpack.c.b16 %v937, %v937
    %939 = vrot.lane.b32.xlu0 %v938, 32
    %v940 = vpop.permute.xlu0 %939
    %v942 = vsel %vm137, %v940, 0
    %944 = vmatprep.subr.bf16.mxu0 0
    %945 = vmatpush1.bf16.msra.mxu0 %v133
    %946 = vmatprep.subr.bf16.mxu0 0
    %947 = vmatpush1.bf16.msra.mxu0 %v134
    %948 = vmatprep.subr.bf16.mxu0 0
    %949 = vmatpush1.bf16.msra.mxu0 0
    %950 = vmatprep.subr.bf16.mxu0 0
    %951 = vmatpush1.bf16.msra.mxu0 0
    %952 = vmatprep.subr.bf16.mxu0 0
    %953 = vmatpush1.bf16.msra.mxu0 0
    %954 = vmatprep.subr.bf16.mxu0 0
    %955 = vmatpush1.bf16.msra.mxu0 0
    %956 = vmatprep.subr.bf16.mxu0 0
    %957 = vmatpush1.bf16.msra.mxu0 0
    %958 = vmatprep.subr.bf16.mxu0 0
    %959 = vmatpush1.bf16.msra.mxu0 0
    %960 = vmatprep.subr.bf16.mxu0 0
    %961 = vmatpush1.bf16.msra.mxu0 0
    %962 = vmatprep.subr.bf16.mxu0 0
    %963 = vmatpush1.bf16.msra.mxu0 0
    %964 = vmatprep.subr.bf16.mxu0 0
    %965 = vmatpush1.bf16.msra.mxu0 0
    %966 = vmatprep.subr.bf16.mxu0 0
    %967 = vmatpush1.bf16.msra.mxu0 0
    %968 = vmatprep.subr.bf16.mxu0 0
    %969 = vmatpush1.bf16.msra.mxu0 0
    %970 = vmatprep.subr.bf16.mxu0 0
    %971 = vmatpush1.bf16.msra.mxu0 0
    %972 = vmatprep.subr.bf16.mxu0 0
    %973 = vmatpush1.bf16.msra.mxu0 0
    %974 = vmatprep.subr.bf16.mxu0 0
    %975 = vmatpush1.bf16.msra.mxu0 0
    %976 = vmatprep.mubr.bf16.mxu0 0
    %977 = vmatmul.mubr.bf16.gmra.mrb[0].mxu0 %v942
    %v978 = vpop.f32.mrb[0].mxu0
    %v979 = vadd.f32 0.0, %v978
    %v980 = vpop.f32.mrb[0].mxu0
    %v981 = vpop.f32.mrb[0].mxu0
    %v982 = vpop.f32.mrb[0].mxu0
    %983 = vdwg.mxu0
    %v985 = vrot.slane %v979, 1
    %v986 = vrot.slane %v979, 2
    %v989 = vadd.f32 %v113, %v985
    %v990 = vadd.f32 %v118, %v986
    %v991 = vxor.u32 %v989, 2147483648
    %v992 = vxor.u32 %v990, 2147483648
    %v993 = vmul.f32 %v991, 1.442695
    %v994 = vpow.pop %v993
    %v995 = vmul.f32 %v992, 1.442695
    %v996 = vpow.pop %v995
    %v997 = vadd.f32 %v994, 1.0
    %v998 = vadd.f32 %v996, 1.0
    %v999 = vrcp.pop %v997
    %v1000 = vmul.f32 1.0, %v999
    %v1001 = vrcp.pop %v998
    %v1002 = vmul.f32 1.0, %v1001
    %v1003 = vtanh.pop %v989
    %v1004 = vtanh.pop %v990
    %v1007 = vrot.slane %v915, 7
    %v1008 = vrot.slane %v916, 7
    %v1011 = vmul.f32 %v1000, %v1007
    %v1012 = vmul.f32 %v1002, %v1008
    %1015 = vrot.lane.b32.xlu0 %v1003, 64
    %v1016 = vpop.permute.xlu0 %1015
    %1017 = vrot.lane.b32.xlu0 %v1004, 64
    %v1018 = vpop.permute.xlu0 %1017
    %v1021 = vmul.f32 %v1000, %v1016
    %v1022 = vmul.f32 %v1002, %v1018
    %1025 = vrot.lane.b32.xlu0 %v1021, 32
    %v1026 = vpop.permute.xlu0 %1025
    %1027 = vrot.lane.b32.xlu0 %v1022, 32
    %v1028 = vpop.permute.xlu0 %1027
    %v1031 = vadd.f32 %v1011, %v1026
    %v1032 = vadd.f32 %v1012, %v1028
    %v1033 = vtanh.pop %v1031
    %v1034 = vtanh.pop %v1032
    %1037 = vrot.lane.b32.xlu0 %v1033, 64
    %v1038 = vpop.permute.xlu0 %1037
    %1039 = vrot.lane.b32.xlu0 %v1034, 64
    %v1040 = vpop.permute.xlu0 %1039
    %v1043 = vmul.f32 %v1000, %v1038
    %v1044 = vmul.f32 %v1002, %v1040
    %v1045 = vld [vmem:[%s4] sm:$0xff]
    %v1046 = vld [vmem:[%s4 + $0x8] sm:$0xff]
    %v1047 = vld [vmem:[%s4 + $0x10] sm:$0xff]
    %v1048 = vld [vmem:[%s4 + $0x18] sm:$0xff]
    %v1049 = vld [vmem:[%s5] sm:$0x1]
    %v1051 = vlaneseq
    %v1052 = vshrl.u32 %v1051, 7
    %v1053 = vsub.s32 0, %v1052
    %v1054 = vrot.slane %v1049, %v1053
    %v1058 = vrot.slane %v1043, 7
    %v1059 = vrot.slane %v1044, 6
    %v1060 = vsel %vm242, %v1059, %v1058
    %1061 = vrot.lane.b32.xlu0 %v1060, 32
    %v1062 = vpop.permute.xlu0 %1061
    %v1063 = vsel %vm137, %v1062, 0
    %1065 = vmatprep.subr.mxu0 0.0
    %1066 = vmatpush1.msra.mxu0 %v1045
    %1067 = vmatprep.subr.mxu0 0.0
    %1068 = vmatpush1.msra.mxu0 %v1046
    %1069 = vmatprep.subr.mxu0 0.0
    %1070 = vmatpush1.msra.mxu0 %v1047
    %1071 = vmatprep.subr.mxu0 0.0
    %1072 = vmatpush1.msra.mxu0 %v1048
    %1073 = vmatprep.subr.mxu0 0.0
    %1074 = vmatpush1.msra.mxu0 0.0
    %1075 = vmatprep.subr.mxu0 0.0
    %1076 = vmatpush1.msra.mxu0 0.0
    %1077 = vmatprep.subr.mxu0 0.0
    %1078 = vmatpush1.msra.mxu0 0.0
    %1079 = vmatprep.subr.mxu0 0.0
    %1080 = vmatpush1.msra.mxu0 0.0
    %1081 = vmatprep.subr.mxu0 0.0
    %1082 = vmatpush1.msra.mxu0 0.0
    %1083 = vmatprep.subr.mxu0 0.0
    %1084 = vmatpush1.msra.mxu0 0.0
    %1085 = vmatprep.subr.mxu0 0.0
    %1086 = vmatpush1.msra.mxu0 0.0
    %1087 = vmatprep.subr.mxu0 0.0
    %1088 = vmatpush1.msra.mxu0 0.0
    %1089 = vmatprep.subr.mxu0 0.0
    %1090 = vmatpush1.msra.mxu0 0.0
    %1091 = vmatprep.subr.mxu0 0.0
    %1092 = vmatpush1.msra.mxu0 0.0
    %1093 = vmatprep.subr.mxu0 0.0
    %1094 = vmatpush1.msra.mxu0 0.0
    %1095 = vmatprep.subr.mxu0 0.0
    %1096 = vmatpush1.msra.mxu0 0.0
    %1097 = vmatprep.subr.mxu0 0.0
    %1098 = vmatpush1.msra.mxu0 0.0
    %1099 = vmatprep.subr.mxu0 0.0
    %1100 = vmatpush1.msra.mxu0 0.0
    %1101 = vmatprep.subr.mxu0 0.0
    %1102 = vmatpush1.msra.mxu0 0.0
    %1103 = vmatprep.subr.mxu0 0.0
    %1104 = vmatpush1.msra.mxu0 0.0
    %1105 = vmatprep.subr.mxu0 0.0
    %1106 = vmatpush1.msra.mxu0 0.0
    %1107 = vmatprep.subr.mxu0 0.0
    %1108 = vmatpush1.msra.mxu0 0.0
    %1109 = vmatprep.subr.mxu0 0.0
    %1110 = vmatpush1.msra.mxu0 0.0
    %1111 = vmatprep.subr.mxu0 0.0
    %1112 = vmatpush1.msra.mxu0 0.0
    %1113 = vmatprep.subr.mxu0 0.0
    %1114 = vmatpush1.msra.mxu0 0.0
    %1115 = vmatprep.subr.mxu0 0.0
    %1116 = vmatpush1.msra.mxu0 0.0
    %1117 = vmatprep.subr.mxu0 0.0
    %1118 = vmatpush1.msra.mxu0 0.0
    %1119 = vmatprep.subr.mxu0 0.0
    %1120 = vmatpush1.msra.mxu0 0.0
    %1121 = vmatprep.subr.mxu0 0.0
    %1122 = vmatpush1.msra.mxu0 0.0
    %1123 = vmatprep.subr.mxu0 0.0
    %1124 = vmatpush1.msra.mxu0 0.0
    %1125 = vmatprep.subr.mxu0 0.0
    %1126 = vmatpush1.msra.mxu0 0.0
    %1127 = vmatprep.subr.mxu0 0.0
    %1128 = vmatpush1.msra.mxu0 0.0
    %1129 = vmatprep.mubr.f32.mxu0 0.0
    %1130 = vmatmul.mubr.f32.gmra.mrb[0].mxu0 %v1063
    %v1131 = vpop.f32.mrb[0].mxu0
    %v1132 = vadd.f32 %v1054, %v1131
    %v1133 = vpop.f32.mrb[0].mxu0
    %1134 = vdwg.mxu0
    %vm1135 = vcmask 17408
    %1136 = vst.msk [vmem:[#allocation2] sm:$0x3] %vm1135, %v1132
    // Predicated region
    $region26: #{janken_lstm_forward.1} parent=1 // pred_check
      _
    $region27: #{janken_lstm_forward.1} parent=1 // pred_check_branch
      %1138 = sbr.rel (0) target = $region29
    $region28: #{janken_lstm_forward.1} parent=1 // pred_region
      %s1140 = ssub.s32 32, 32
      %1141 = vsyncadd [#allocation3], %s1140
      %s1143 = sshll.u32 [#allocation2], 4
      %s1144 = int_to_ptr.vmem [resolvable:$true] %s1143
      %1146 = dma.vmem_to_hbm [thread:$0]  %s1144, 32, %s6, [#allocation3]
    $region29: #{janken_lstm_forward.1} parent=1 // pred_fallthru
      _
    // Predicated region
    $region30: #{janken_lstm_forward.1} parent=1 // pred_check
      _
    $region31: #{janken_lstm_forward.1} parent=1 // pred_check_branch
      %1148 = sbr.rel (0) target = $region33
    $region32: #{janken_lstm_forward.1} parent=1 // pred_region
      %1149 = dma.done [#allocation3], 32
    $region33: #{janken_lstm_forward.1} parent=1 // pred_fallthru
      _
    %1150 = vsyncpa [#allocation3], 1

</llo_original>
